<compile_context>
chip_gen: v7x
topology: tpu7x:2x2x1
jax: 0.10.0
libtpu: 0.0.40
codegen_flags: <defaults>
</compile_context>

<pallas_src>
import functools

import jax
import jax.numpy as jnp
import numpy as np
from jax.experimental import pallas as pl
from jax.experimental.pallas import tpu as pltpu

VMEM_LIMIT = 32 * 1024 * 1024   # safe on v5e/v6e (128 MiB) and v7x (64 MiB physical)


# ----------------------------------------------------------------------------
# Kernels
# ----------------------------------------------------------------------------
def embed_kernel(x_ref, w_ref, bp_ref, o_ref):
    """tokens = x @ W_embed + (b_embed + pos); bias is pre-tiled to the row block."""
    x = x_ref[...]                                    # (TILE, C) f32, C tiny
    acc = bp_ref[...]                                 # (TILE, D) bias + pos, pre-tiled
    for c in range(x.shape[1]):                       # C unrolled -> a few VPU madds
        acc = acc + x[:, c:c + 1] * w_ref[c:c + 1, :]
    o_ref[...] = acc


def attn_kernel(x_ref, g_ref, b_ref, wqkv_ref, wp_ref, bp_ref, o_ref, *,
                num_heads, head_dim, seq_len, eps):
    """PreNorm multi-head attention with residual.

    The block holds G whole sequences of length S flattened into (R, D) rows.
    Attention is computed per sequence group (block-diagonal structure is
    exploited directly; no dense mask), heads are fused into a single
    projection matmul.

      out = x + b_proj + concat_h( softmax(q_h k_h^T) v_h ) @ Wp
    """
    x = x_ref[...]                                    # (R, D) f32
    R, D = x.shape
    H, hd, S = num_heads, head_dim, seq_len
    G = R // S

    # LayerNorm (torch default eps=1e-5), in f32.
    mu = jnp.mean(x, axis=-1, keepdims=True)
    var = jnp.mean((x - mu) ** 2, axis=-1, keepdims=True)
    xn = (x - mu) * jax.lax.rsqrt(var + eps) * g_ref[...] + b_ref[...]

    # Fused QKV: one lane-dense (R, D) x (D, 3D) bf16 matmul, f32 accumulation.
    # The attention scale is pre-folded into the Q columns of wqkv.
    qkv = jnp.dot(xn.astype(jnp.bfloat16), wqkv_ref[...],
                  preferred_element_type=jnp.float32)             # (R, 3D)
    qkv = qkv.astype(jnp.bfloat16).reshape(G, S, 3 * D)           # per-sequence groups

    head_outs = []
    for h in range(H):                                # heads unrolled at trace time
        q = qkv[:, :, h * hd:(h + 1) * hd]            # (G, S, hd) bf16, already scaled
        k = qkv[:, :, D + h * hd:D + (h + 1) * hd]
        v = qkv[:, :, 2 * D + h * hd:2 * D + (h + 1) * hd]
        s = jnp.einsum('gqd,gkd->gqk', q, k,
                       preferred_element_type=jnp.float32)        # (G, S, S)
        s = s - jnp.max(s, axis=-1, keepdims=True)
        p = jnp.exp(s)
        p = p * pl.reciprocal(jnp.sum(p, axis=-1, keepdims=True), approx=True)
        head_outs.append(jnp.einsum('gqk,gkd->gqd', p.astype(jnp.bfloat16), v,
                                    preferred_element_type=jnp.float32))  # (G, S, hd)

    heads = jnp.concatenate(head_outs, axis=-1).reshape(R, D)     # (R, D) f32
    # Single fused projection: (R, D) x (D, D) bf16 matmul, f32 accumulation.
    proj = jnp.dot(heads.astype(jnp.bfloat16), wp_ref[...],
                   preferred_element_type=jnp.float32)
    o_ref[...] = x + bp_ref[...] + proj


def ff_kernel(y_ref, g_ref, b_ref, w1_ref, b1_ref, w2_ref, b2_ref, o_ref, *, eps):
    """FeedForward block, matching the module's residual wiring:
       out = y + norm1(y) + MLP(norm1(y))."""
    y = y_ref[...]                                    # (TILE, D) f32
    mu = jnp.mean(y, axis=-1, keepdims=True)
    var = jnp.mean((y - mu) ** 2, axis=-1, keepdims=True)
    n = (y - mu) * jax.lax.rsqrt(var + eps) * g_ref[...] + b_ref[...]

    hdn = jnp.dot(n.astype(jnp.bfloat16), w1_ref[...],
                  preferred_element_type=jnp.float32) + b1_ref[...]
    hdn = 0.5 * hdn * (1.0 + jax.lax.erf(hdn * (2.0 ** -0.5)))    # exact GELU (F.gelu)
    m = jnp.dot(hdn.astype(jnp.bfloat16), w2_ref[...],
                preferred_element_type=jnp.float32) + b2_ref[...]
    o_ref[...] = y + n + m


def norm_mean_kernel(x_ref, g_ref, b_ref, o_ref, *, eps):
    """Final LayerNorm(512, eps=1e-6) followed by mean over the token axis."""
    x = x_ref[0]                                      # (T*V, D)
    mu = jnp.mean(x, axis=-1, keepdims=True)
    var = jnp.mean((x - mu) ** 2, axis=-1, keepdims=True)
    n = (x - mu) * jax.lax.rsqrt(var + eps) * g_ref[...] + b_ref[...]
    o_ref[...] = jnp.mean(n, axis=0, keepdims=True)   # (1, D)


# ----------------------------------------------------------------------------
# Block-size helpers (always try to leave a grid of >= 2 steps for v7x megacore)
# ----------------------------------------------------------------------------
def _attn_rows(n_seq, seq_len, target=256):
    """rows = g*seq_len with g | n_seq, rows % 8 == 0 (or the full extent),
    preferring the largest rows <= target that still leaves >= 2 grid steps."""
    cands = []
    for g in range(1, n_seq + 1):
        if n_seq % g:
            continue
        r = g * seq_len
        if r % 8 != 0 and g != n_seq:
            continue
        cands.append((g, r))

    def best(pred):
        sel = [r for g, r in cands if pred(g, r)]
        return max(sel) if sel else None

    r = best(lambda g, r: r <= target and n_seq // g >= 2)
    if r is None:
        r = best(lambda g, r: r <= target)
    if r is None:
        r = min(r for _, r in cands)
    return r


def _ff_tile(ntok, target=512):
    best = None
    for t in range(8, min(ntok, target) + 1, 8):
        if ntok % t == 0 and ntok // t >= 2:
            best = t
    if best is None:
        for t in range(8, min(ntok, target) + 1, 8):
            if ntok % t == 0:
                best = t
    return best if best is not None else ntok


def _embed_tile(rows, v, target=512):
    best = None
    t = v
    while t <= rows:
        if rows % t == 0 and (t % 8 == 0 or t == rows):
            if t <= target and rows // t >= 2:
                best = t
        t += v
    if best is None:
        t = v
        while t <= rows:
            if rows % t == 0 and (t % 8 == 0 or t == rows):
                best = t
                if t >= target:
                    break
            t += v
    return best if best is not None else rows


# ----------------------------------------------------------------------------
# Pallas wrappers
# ----------------------------------------------------------------------------
def embed(x, we, be, pos):
    BT, V, C = x.shape
    D = we.shape[1]
    rows = BT * V
    tile = _embed_tile(rows, V)
    bias_tile = jnp.tile((be + pos).astype(jnp.float32), (tile // V, 1))   # (tile, D)
    x2 = x.reshape(rows, C)
    out = pl.pallas_call(
        embed_kernel,
        out_shape=jax.ShapeDtypeStruct((rows, D), jnp.float32),
        grid=(rows // tile,),
        in_specs=[
            pl.BlockSpec((tile, C), lambda i: (i, 0)),
            pl.BlockSpec((C, D), lambda i: (0, 0)),
            pl.BlockSpec((tile, D), lambda i: (0, 0)),
        ],
        out_specs=pl.BlockSpec((tile, D), lambda i: (i, 0)),
        compiler_params=pltpu.CompilerParams(dimension_semantics=("parallel",)),
    )(x2, we, bias_tile)
    return out.reshape(BT, V, D)


def prenorm_attention(x, p, *, num_heads, scale, eps=1e-5):
    BATCH, S, D = x.shape
    hd = D // num_heads
    R = _attn_rows(BATCH, S)
    ntok = BATCH * S
    x2 = x.reshape(ntok, D)
    # Fold the attention scale into the Q columns of wqkv (exact for power-of-two
    # scales such as 64^-0.5 = 0.125); removes the in-kernel q*scale multiply.
    wqkv = p['wqkv'].at[:, :D].multiply(jnp.asarray(scale, p['wqkv'].dtype))

    kern = functools.partial(attn_kernel, num_heads=num_heads, head_dim=hd,
                             seq_len=S, eps=eps)
    out = pl.pallas_call(
        kern,
        out_shape=jax.ShapeDtypeStruct((ntok, D), jnp.float32),
        grid=(ntok // R,),
        in_specs=[
            pl.BlockSpec((R, D), lambda i: (i, 0)),
            pl.BlockSpec((1, D), lambda i: (0, 0)),
            pl.BlockSpec((1, D), lambda i: (0, 0)),
            pl.BlockSpec((D, 3 * D), lambda i: (0, 0)),
            pl.BlockSpec((D, D), lambda i: (0, 0)),
            pl.BlockSpec((1, D), lambda i: (0, 0)),
        ],
        out_specs=pl.BlockSpec((R, D), lambda i: (i, 0)),
        compiler_params=pltpu.CompilerParams(
            dimension_semantics=("parallel",),
            vmem_limit_bytes=VMEM_LIMIT),
    )(x2, p['ln_g'], p['ln_b'], wqkv, p['wp'], p['bp'])
    return out.reshape(BATCH, S, D)


def ff_block(y, p, *, eps=1e-5):
    BATCH, S, D = y.shape
    F = p['w1'].shape[1]
    ntok = BATCH * S
    tile = _ff_tile(ntok)
    y2 = y.reshape(ntok, D)
    out = pl.pallas_call(
        functools.partial(ff_kernel, eps=eps),
        out_shape=jax.ShapeDtypeStruct((ntok, D), jnp.float32),
        grid=(ntok // tile,),
        in_specs=[
            pl.BlockSpec((tile, D), lambda i: (i, 0)),
            pl.BlockSpec((1, D), lambda i: (0, 0)),
            pl.BlockSpec((1, D), lambda i: (0, 0)),
            pl.BlockSpec((D, F), lambda i: (0, 0)),
            pl.BlockSpec((1, F), lambda i: (0, 0)),
            pl.BlockSpec((F, D), lambda i: (0, 0)),
            pl.BlockSpec((1, D), lambda i: (0, 0)),
        ],
        out_specs=pl.BlockSpec((tile, D), lambda i: (i, 0)),
        compiler_params=pltpu.CompilerParams(
            dimension_semantics=("parallel",),
            vmem_limit_bytes=VMEM_LIMIT),
    )(y2, p['ln_g'], p['ln_b'], p['w1'], p['b1'], p['w2'], p['b2'])
    return out.reshape(BATCH, S, D)


def final_norm_mean(x, g, b, eps=1e-6):
    B, L, D = x.shape
    return pl.pallas_call(
        functools.partial(norm_mean_kernel, eps=eps),
        out_shape=jax.ShapeDtypeStruct((B, D), jnp.float32),
        grid=(B,),
        in_specs=[
            pl.BlockSpec((1, L, D), lambda i: (i, 0, 0)),
            pl.BlockSpec((1, D), lambda i: (0, 0)),
            pl.BlockSpec((1, D), lambda i: (0, 0)),
        ],
        out_specs=pl.BlockSpec((1, D), lambda i: (i, 0)),
        compiler_params=pltpu.CompilerParams(dimension_semantics=("parallel",)),
    )(x, g, b)


# ----------------------------------------------------------------------------
# Full forward (glue mirrors the PyTorch forward exactly)
# ----------------------------------------------------------------------------
def st_attn_st_forward(x, params):
    N, M, T, V, C = x.shape
    D = params['we'].shape[1]
    H = params['num_heads']
    scale = (D // H) ** (-0.5)

    # exact replication of: permute(0,1,3,4,2) -> permute(0,1,4,3,2) -> view(N*M,T,V,C)
    x = jnp.transpose(x, (0, 1, 3, 4, 2))       # (N, M, V, C, T)
    x = jnp.transpose(x, (0, 1, 4, 3, 2))       # (N, M, T, C, V)
    x = x.reshape(N * M, T, V, C)               # reinterprets (C, V) as (V, C), as in torch
    B = N * M

    x = embed(x.reshape(B * T, V, C), params['we'], params['be'], params['pos'])
    # spatial layout: (B*T, V, D)

    for lp in params['layers']:
        sp = prenorm_attention(x, lp['sp'], num_heads=H, scale=scale)      # spatial attn (+res)
        # TODO(synk): this layout transpose (and its inverse below) is a host-side
        # HBM round trip; can be folded into BlockSpec index_maps.
        sp = sp.reshape(B, T, V, D).transpose(0, 2, 1, 3).reshape(B * V, T, D)
        tp = prenorm_attention(sp, lp['tmp'], num_heads=H, scale=scale)    # temporal attn (+res)
        y = ff_block(tp, lp['ff'])                                         # feed-forward (+res)
        x = y.reshape(B, V, T, D).transpose(0, 2, 1, 3).reshape(B * T, V, D)

    x = x.reshape(B, T * V, D)
    out = final_norm_mean(x, params['gn'], params['bn'])    # LayerNorm(512, eps=1e-6) + mean
    return out.reshape(N, M, D)


# ----------------------------------------------------------------------------
# Deterministic parameter init (synthetic, xavier-ish scale; weights in bf16)
# ----------------------------------------------------------------------------
def init_params(key, C, D, H, F, V, depth):
    def nrm(k, shape, s=0.02, dtype=jnp.float32):
        return (jax.random.normal(k, shape, jnp.float32) * s).astype(dtype)

    keys = jax.random.split(key, 3 + depth)
    params = {
        'num_heads': H,
        'we': nrm(keys[0], (C, D)),
        'be': nrm(keys[1], (1, D)),
        'pos': nrm(keys[2], (V, D)),          # pos_embedding is identical across T
        'gn': jnp.ones((1, D), jnp.float32),
        'bn': jnp.zeros((1, D), jnp.float32),
        'layers': [],
    }

    def attn_params(k):
        k1, k2, k3 = jax.random.split(k, 3)
        return {
            'ln_g': jnp.ones((1, D), jnp.float32),
            'ln_b': jnp.zeros((1, D), jnp.float32),
            'wqkv': nrm(k1, (D, 3 * D), dtype=jnp.bfloat16),   # = qkv.weight^T
            'wp': nrm(k2, (D, D), dtype=jnp.bfloat16),         # = proj.weight^T
            'bp': nrm(k3, (1, D)),
        }

    def ff_params(k):
        k1, k2, k3, k4 = jax.random.split(k, 4)
        return {
            'ln_g': jnp.ones((1, D), jnp.float32),
            'ln_b': jnp.zeros((1, D), jnp.float32),
            'w1': nrm(k1, (D, F), dtype=jnp.bfloat16),
            'b1': nrm(k2, (1, F)),
            'w2': nrm(k3, (F, D), dtype=jnp.bfloat16),
            'b2': nrm(k4, (1, D)),
        }

    for li in range(depth):
        k_sp, k_tmp, k_ff = jax.random.split(keys[3 + li], 3)
        params['layers'].append({'sp': attn_params(k_sp),
                                 'tmp': attn_params(k_tmp),
                                 'ff': ff_params(k_ff)})
    return params


# ----------------------------------------------------------------------------
# Pure-JAX reference (f32, for correctness checking)
# ----------------------------------------------------------------------------
def _ref_ln(x, g, b, eps):
    mu = jnp.mean(x, -1, keepdims=True)
    var = jnp.mean((x - mu) ** 2, -1, keepdims=True)
    return (x - mu) / jnp.sqrt(var + eps) * g + b


def _ref_attn(x, p, scale, H):
    D = x.shape[-1]
    hd = D // H
    n = _ref_ln(x, p['ln_g'][0], p['ln_b'][0], 1e-5)
    qkv = n @ p['wqkv'].astype(jnp.float32)                       # (B, S, 3D)
    q, k, v = jnp.split(qkv, 3, axis=-1)

    def heads(t):                                                 # (B,S,D)->(B,H,S,hd)
        B, S, _ = t.shape
        return t.reshape(B, S, H, hd).transpose(0, 2, 1, 3)

    q, k, v = heads(q) * scale, heads(k), heads(v)
    a = jax.nn.softmax(jnp.einsum('bhie,bhje->bhij', q, k), -1)
    o = jnp.einsum('bhij,bhje->bhie', a, v)
    o = o.transpose(0, 2, 1, 3).reshape(x.shape)
    return x + o @ p['wp'].astype(jnp.float32) + p['bp'][0]


def _ref_ff(y, p):
    n = _ref_ln(y, p['ln_g'][0], p['ln_b'][0], 1e-5)
    h = jax.nn.gelu(n @ p['w1'].astype(jnp.float32) + p['b1'][0], approximate=False)
    return y + n + (h @ p['w2'].astype(jnp.float32) + p['b2'][0])


def reference_forward(x, params):
    N, M, T, V, C = x.shape
    D = params['we'].shape[1]
    H = params['num_heads']
    scale = (D // H) ** (-0.5)
    x = jnp.transpose(x, (0, 1, 3, 4, 2))
    x = jnp.transpose(x, (0, 1, 4, 3, 2))
    x = x.reshape(N * M, T, V, C)
    B = N * M
    tok = jnp.einsum('btvc,cd->btvd', x, params['we']) + params['be'][0] + params['pos']
    x = tok.reshape(B * T, V, D)
    for lp in params['layers']:
        sp = _ref_attn(x, lp['sp'], scale, H)
        sp = sp.reshape(B, T, V, D).transpose(0, 2, 1, 3).reshape(B * V, T, D)
        tp = _ref_attn(sp, lp['tmp'], scale, H)
        y = _ref_ff(tp, lp['ff'])
        x = y.reshape(B, V, T, D).transpose(0, 2, 1, 3).reshape(B * T, V, D)
    x = x.reshape(B, T * V, D)
    n = _ref_ln(x, params['gn'][0], params['bn'][0], 1e-6)
    return jnp.mean(n, axis=1).reshape(N, M, D)


# ----------------------------------------------------------------------------
if __name__ == "__main__":
    # dim = hidden_dim * num_heads must equal 512 because the module hardcodes
    # nn.LayerNorm(512) for the final norm.
    N, M, T, V, C = 1, 2, 4, 8, 3
    hidden_dim, num_heads, depth, mlp_ratio = 64, 8, 2, 4
    D = hidden_dim * num_heads          # 512
    F = D * mlp_ratio                   # 2048

    key = jax.random.PRNGKey(0)
    kx, kp = jax.random.split(key)
    x = jax.random.normal(kx, (N, M, T, V, C), jnp.float32)
    params = init_params(kp, C, D, num_heads, F, V, depth)

    out = st_attn_st_forward(x, params)
    out = jax.block_until_ready(out)
    assert out.shape == (N, M, D)

    ref = reference_forward(x, params)
    # bf16 matmul operands (f32 accumulation) in the kernels -> looser tolerance.
    np.testing.assert_allclose(np.asarray(out), np.asarray(ref), rtol=2e-2, atol=2e-2)

    # TODO(synk): Dropout / DropPath / attention dropout are stochastic, training-only
    # ops; they are identity in eval mode and intentionally not implemented.
    print("KERNEL_OK")
</pallas_src>

<mosaic_0001>
module attributes {stable_mosaic.version = 11 : i64} {
  func.func @embed_kernel(%arg0: i32, %arg1: memref<32x3xf32, #tpu.memory_space<vmem>>, %arg2: memref<3x512xf32, #tpu.memory_space<vmem>>, %arg3: memref<32x512xf32, #tpu.memory_space<vmem>>, %arg4: memref<32x512xf32, #tpu.memory_space<vmem>>) attributes {dimension_semantics = [#tpu.dimension_semantics<parallel>], iteration_bounds = array<i64: 2>, scalar_prefetch = 0 : i64, scratch_operands = 0 : i64, tpu.core_type = #tpu.core_type<tc>, window_params = [{transform_indices = @transform_0, window_bounds = array<i64: 32, 3>}, {pipeline_mode = #tpu.pipeline_mode<synchronous>, transform_indices = @transform_1, window_bounds = array<i64: 3, 512>}, {pipeline_mode = #tpu.pipeline_mode<synchronous>, transform_indices = @transform_2, window_bounds = array<i64: 32, 512>}, {transform_indices = @transform_3, window_bounds = array<i64: 32, 512>}]} {
    %c0 = arith.constant 0 : index
    %c0_0 = arith.constant 0 : index
    %0 = vector.load %arg1[%c0, %c0_0] : memref<32x3xf32, #tpu.memory_space<vmem>>, vector<32x3xf32>
    %c0_1 = arith.constant 0 : index
    %c0_2 = arith.constant 0 : index
    %1 = vector.load %arg3[%c0_1, %c0_2] : memref<32x512xf32, #tpu.memory_space<vmem>>, vector<32x512xf32>
    %2 = vector.extract_strided_slice %0 {offsets = [0, 0], sizes = [32, 1], strides = [1, 1]} : vector<32x3xf32> to vector<32x1xf32>
    %c0_3 = arith.constant 0 : index
    %c0_4 = arith.constant 0 : index
    %3 = vector.load %arg2[%c0_3, %c0_4] : memref<3x512xf32, #tpu.memory_space<vmem>>, vector<1x512xf32>
    %4 = vector.broadcast %2 : vector<32x1xf32> to vector<32x512xf32>
    %5 = vector.broadcast %3 : vector<1x512xf32> to vector<32x512xf32>
    %6 = arith.mulf %4, %5 : vector<32x512xf32>
    %7 = arith.addf %1, %6 : vector<32x512xf32>
    %8 = vector.extract_strided_slice %0 {offsets = [0, 1], sizes = [32, 1], strides = [1, 1]} : vector<32x3xf32> to vector<32x1xf32>
    %c1 = arith.constant 1 : index
    %c0_5 = arith.constant 0 : index
    %9 = vector.load %arg2[%c1, %c0_5] : memref<3x512xf32, #tpu.memory_space<vmem>>, vector<1x512xf32>
    %10 = vector.broadcast %8 : vector<32x1xf32> to vector<32x512xf32>
    %11 = vector.broadcast %9 : vector<1x512xf32> to vector<32x512xf32>
    %12 = arith.mulf %10, %11 : vector<32x512xf32>
    %13 = arith.addf %7, %12 : vector<32x512xf32>
    %14 = vector.extract_strided_slice %0 {offsets = [0, 2], sizes = [32, 1], strides = [1, 1]} : vector<32x3xf32> to vector<32x1xf32>
    %c2 = arith.constant 2 : index
    %c0_6 = arith.constant 0 : index
    %15 = vector.load %arg2[%c2, %c0_6] : memref<3x512xf32, #tpu.memory_space<vmem>>, vector<1x512xf32>
    %16 = vector.broadcast %14 : vector<32x1xf32> to vector<32x512xf32>
    %17 = vector.broadcast %15 : vector<1x512xf32> to vector<32x512xf32>
    %18 = arith.mulf %16, %17 : vector<32x512xf32>
    %19 = arith.addf %13, %18 : vector<32x512xf32>
    %c0_7 = arith.constant 0 : index
    %c0_8 = arith.constant 0 : index
    %20 = vector.load %arg4[%c0_7, %c0_8] : memref<32x512xf32, #tpu.memory_space<vmem>>, vector<32x512xf32>
    tpu.vector_store %arg4[%c0_7, %c0_8], %19 {strides = array<i32>} : memref<32x512xf32, #tpu.memory_space<vmem>>, vector<32x512xf32>,
    return
  }
  func.func @transform_0(%arg0: i32) -> (i32, i32) {
    %c0_i32 = arith.constant 0 : i32
    %c0_i32_0 = arith.constant 0 : i32
    return %arg0, %c0_i32 : i32, i32
  }
  func.func @transform_1(%arg0: i32) -> (i32, i32) {
    %c0_i32 = arith.constant 0 : i32
    %c0_i32_0 = arith.constant 0 : i32
    %c0_i32_1 = arith.constant 0 : i32
    return %c0_i32, %c0_i32_0 : i32, i32
  }
  func.func @transform_2(%arg0: i32) -> (i32, i32) {
    %c0_i32 = arith.constant 0 : i32
    %c0_i32_0 = arith.constant 0 : i32
    %c0_i32_1 = arith.constant 0 : i32
    return %c0_i32, %c0_i32_0 : i32, i32
  }
  func.func @transform_3(%arg0: i32) -> (i32, i32) {
    %c0_i32 = arith.constant 0 : i32
    %c0_i32_0 = arith.constant 0 : i32
    return %arg0, %c0_i32 : i32, i32
  }
}

</mosaic_0001>

<llo_original>
// kernel: tpu_custom_call.1
$region0: #{tpu_custom_call.1}
  #allocation0 [shape = 'u32[]', space=smem, size = 0x4, offset = 0x4, fixed_abs, tag = 'smem constant byte address 0x4 - core index']
  #allocation1 [shape = 'u32[144,128]{1,0:T(1,128)}', space=vmem, size = 0x12000, scoped, tag = 'internal scratch']
  %s0 = inlined_call_operand.vmem [shape: f32[64,3], index: 0, kind: input, shape index: {}]
  %s1 = inlined_call_operand.vmem [shape: f32[3,512], index: 1, kind: input, shape index: {}]
  %s2 = inlined_call_operand.hbm [shape: f32[32,512], index: 2, kind: input, shape index: {}]
  %s3 = inlined_call_operand.hbm [shape: f32[64,512], index: 3, kind: output, shape index: {}]
  %s4 = sld [smem:[#allocation0]]
  $region49: #{tpu_custom_call.1} parent=0
    _
  %s6 = ssub.s32 1, %s4
  %s7 = scalar_select 0, %s6, %s4
  $region1: #{tpu_custom_call.1} parent=0
    #allocation2 [shape = 'u8[65536]{0}', space=vmem, size = 0x10000, scoped, tag = 'input window, operand 2, single buffered']
    #allocation3 [shape = 's32[2]{0}', space=sflag, size = 0x8, scoped, tag = 'scoped memory for tpu_custom_call.1']
    #allocation4 [shape = 's32[2]{0}', space=sflag, size = 0x8, scoped, tag = 'scoped memory for tpu_custom_call.1']
    #allocation5 [shape = 'u8[131072]{0}', space=vmem, size = 0x20000, scoped, tag = 'output window, operand 0']
    %8 = vsyncpa [#allocation3], 0
    %9 = vsyncpa [#allocation4], 0
    %s10 = scalar_lea.sflag [#allocation4], 1
    %11 = vsyncpa %s10, 0
    loop: start=0, step=1, limit=4
    $region2: #{tpu_custom_call.1} parent=1 // loop_pre_header
      _
    $region3: #{tpu_custom_call.1} parent=1 // loop_header
      %s13 = sphi 0, %s17
      %p14 = scmp.ge.s32.totalorder %s13, 4
      %s23 = sphi 0, %s25
      %s26 = sphi 0, %s23
      %s27 = sphi 0, %s26
      %s43 = sphi 0, %s27
      %s47 = sphi 0, %s47
      %s49 = sphi 0, %s47
      %s50 = sphi 0, %s49
      %s64 = sphi 0, %s50
      %s68 = sphi 0, %s68
      %s70 = sphi 0, %s68
      %s71 = sphi 0, %s70
      %s85 = sphi 0, %s71
      %s91 = sphi 0, %s93
      %s94 = sphi 0, %s91
      %s95 = sphi 0, %s94
      %s111 = sphi 0, %s95
    $region4: #{tpu_custom_call.1} parent=1 // loop_header_branch
      %16 = sbr.rel (%p14) target = $region8
    $region5: #{tpu_custom_call.1} parent=1 // loop_body
      %s18 = ssub.s32 %s13, 1
      %s19 = ssub.s32 %s13, 2
      %s20 = sadd.s32 %s13, 1
      %s21 = ssub.s32 %s13, %s20
      %p22 = scmp.eq.s32.totalorder %s21, 0
      %s24 = sadd.s32 %s23, 1
      %s25 = scalar_select %p22, %s23, %s24
      %p28 = pneg %p22
      %p29 = scmp.eq.s32.totalorder %s13, 1
      %p30 = por %p28, %p29
      %p31 = scmp.ne.s32.totalorder %s23, %s26
      %p32 = scmp.eq.s32.totalorder %s13, 0
      %p33 = por %p31, %p32
      %p34 = scmp.ne.s32.totalorder %s23, %s26
      %p35 = scmp.eq.s32.totalorder %s18, 1
      %p36 = por %p34, %p35
      %p37 = scmp.ne.s32.totalorder %s26, %s27
      %p38 = scmp.eq.s32.totalorder %s18, 0
      %p39 = por %p37, %p38
      %p40 = scmp.ne.s32.totalorder %s26, %s27
      %p41 = scmp.eq.s32.totalorder %s19, 1
      %p42 = por %p40, %p41
      %p44 = scmp.ne.s32.totalorder %s27, %s43
      %p45 = scmp.eq.s32.totalorder %s19, 0
      %p46 = por %p44, %p45
      %s48 = sadd.s32 %s47, 1
      %p51 = scmp.eq.s32.totalorder %s13, 1
      %p52 = scmp.ne.s32.totalorder %s47, %s49
      %p53 = scmp.eq.s32.totalorder %s13, 0
      %p54 = por %p52, %p53
      %p55 = scmp.ne.s32.totalorder %s47, %s49
      %p56 = scmp.eq.s32.totalorder %s18, 1
      %p57 = por %p55, %p56
      %p58 = scmp.ne.s32.totalorder %s49, %s50
      %p59 = scmp.eq.s32.totalorder %s18, 0
      %p60 = por %p58, %p59
      %p61 = scmp.ne.s32.totalorder %s49, %s50
      %p62 = scmp.eq.s32.totalorder %s19, 1
      %p63 = por %p61, %p62
      %p65 = scmp.ne.s32.totalorder %s50, %s64
      %p66 = scmp.eq.s32.totalorder %s19, 0
      %p67 = por %p65, %p66
      %s69 = sadd.s32 %s68, 1
      %p72 = scmp.eq.s32.totalorder %s13, 1
      %p73 = scmp.ne.s32.totalorder %s68, %s70
      %p74 = scmp.eq.s32.totalorder %s13, 0
      %p75 = por %p73, %p74
      %p76 = scmp.ne.s32.totalorder %s68, %s70
      %p77 = scmp.eq.s32.totalorder %s18, 1
      %p78 = por %p76, %p77
      %p79 = scmp.ne.s32.totalorder %s70, %s71
      %p80 = scmp.eq.s32.totalorder %s18, 0
      %p81 = por %p79, %p80
      %p82 = scmp.ne.s32.totalorder %s70, %s71
      %p83 = scmp.eq.s32.totalorder %s19, 1
      %p84 = por %p82, %p83
      %p86 = scmp.ne.s32.totalorder %s71, %s85
      %p87 = scmp.eq.s32.totalorder %s19, 0
      %p88 = por %p86, %p87
      %s89 = ssub.s32 %s13, %s20
      %p90 = scmp.eq.s32.totalorder %s89, 0
      %s92 = sadd.s32 %s91, 1
      %s93 = scalar_select %p90, %s91, %s92
      %p96 = pneg %p90
      %p97 = scmp.eq.s32.totalorder %s13, 1
      %p98 = por %p96, %p97
      %p99 = scmp.ne.s32.totalorder %s91, %s94
      %p100 = scmp.eq.s32.totalorder %s13, 0
      %p101 = por %p99, %p100
      %p102 = scmp.ne.s32.totalorder %s91, %s94
      %p103 = scmp.eq.s32.totalorder %s18, 1
      %p104 = por %p102, %p103
      %p105 = scmp.ne.s32.totalorder %s94, %s95
      %p106 = scmp.eq.s32.totalorder %s18, 0
      %p107 = por %p105, %p106
      %p108 = scmp.ne.s32.totalorder %s94, %s95
      %p109 = scmp.eq.s32.totalorder %s19, 1
      %p110 = por %p108, %p109
      %p112 = scmp.ne.s32.totalorder %s95, %s111
      %p113 = scmp.eq.s32.totalorder %s19, 0
      %p114 = por %p112, %p113
      %p115 = scmp.le.s32.totalorder 1, %s13
      %p116 = scmp.lt.s32.totalorder %s13, 3
      %p117 = pnand %p115, %p116
      %p118 = pneg %p117
      // Predicated region
      $region9: #{tpu_custom_call.1} parent=5 // pred_check
        _
      $region10: #{tpu_custom_call.1} parent=5 // pred_check_branch
        %120 = sbr.rel (%p117) target = $region12
      $region11: #{tpu_custom_call.1} parent=5 // pred_region
        %s121 = ssub.s32 %s13, 1
        // Predicated region
        $region13: #{tpu_custom_call.1} parent=11 // pred_check
          %p122 = pneg %p60
        $region14: #{tpu_custom_call.1} parent=11 // pred_check_branch
          %124 = sbr.rel (%p122) target = $region16
        $region15: #{tpu_custom_call.1} parent=11 // pred_region
          _
        $region16: #{tpu_custom_call.1} parent=11 // pred_fallthru
          _
        // Predicated region
        $region17: #{tpu_custom_call.1} parent=11 // pred_check
          %p125 = pneg %p81
        $region18: #{tpu_custom_call.1} parent=11 // pred_check_branch
          %127 = sbr.rel (%p125) target = $region20
        $region19: #{tpu_custom_call.1} parent=11 // pred_region
          %s129 = ssub.s32 2048, 2048
          %130 = vsyncadd [#allocation3], %s129
          %s131 = sshll.u32 [#allocation2], 4
          %s132 = int_to_ptr.vmem [resolvable:$true] %s131
          %137 = dma.hbm_to_vmem [thread:$0]  %s2, 2048, %s132, [#allocation3], 512, 512, 32
        $region20: #{tpu_custom_call.1} parent=11 // pred_fallthru
          _
      $region12: #{tpu_custom_call.1} parent=5 // pred_fallthru
        _
      %p138 = scmp.lt.s32.totalorder %s13, 2
      // Predicated region
      $region21: #{tpu_custom_call.1} parent=5 // pred_check
        %p139 = pneg %p138
      $region22: #{tpu_custom_call.1} parent=5 // pred_check_branch
        %141 = sbr.rel (%p139) target = $region24
      $region23: #{tpu_custom_call.1} parent=5 // pred_region
        // Predicated region
        $region25: #{tpu_custom_call.1} parent=23 // pred_check
          %p142 = pneg %p33
        $region26: #{tpu_custom_call.1} parent=23 // pred_check_branch
          %144 = sbr.rel (%p142) target = $region28
        $region27: #{tpu_custom_call.1} parent=23 // pred_region
          %s145 = smul.u32 4, %s13
          %p146 = scmp.lt.s32.totalorder %s145, 7
          %s147 = scalar_select %p146, %s145, 7
          %s148 = smul.addr %s147, 8
          %s149 = scalar_lea.vmem %s0, %s148
          %s150 = smul.u32 4, %s13
        $region28: #{tpu_custom_call.1} parent=23 // pred_fallthru
          _
      $region24: #{tpu_custom_call.1} parent=5 // pred_fallthru
        _
      %p151 = scmp.le.s32.totalorder 1, %s13
      %p152 = scmp.lt.s32.totalorder %s13, 3
      %p153 = pnand %p151, %p152
      %p154 = pneg %p153
      // Predicated region
      $region29: #{tpu_custom_call.1} parent=5 // pred_check
        _
      $region30: #{tpu_custom_call.1} parent=5 // pred_check_branch
        %156 = sbr.rel (%p153) target = $region32
      $region31: #{tpu_custom_call.1} parent=5 // pred_region
        %s157 = ssub.s32 %s13, 1
        // Predicated region
        $region33: #{tpu_custom_call.1} parent=31 // pred_check
          %p158 = pneg %p81
        $region34: #{tpu_custom_call.1} parent=31 // pred_check_branch
          %160 = sbr.rel (%p158) target = $region36
        $region35: #{tpu_custom_call.1} parent=31 // pred_region
          %161 = dma.done [#allocation3], 2048
        $region36: #{tpu_custom_call.1} parent=31 // pred_fallthru
          _
        %s162 = smul.u32 4, %s18
        %p163 = scmp.lt.s32.totalorder %s162, 7
        %s164 = scalar_select %p163, %s162, 7
        %s165 = smul.addr %s164, 8
        %s166 = scalar_lea.vmem %s0, %s165
        %p167 = pneg %p39
        %p168 = pneg %p36
        %p169 = pneg %p60
        %p170 = pneg %p57
        %p171 = pneg %p81
        %p172 = pneg %p78
        %p173 = pneg %p107
        %p174 = pneg %p104
        %s175 = sand.u32 %s94, 1
        %s176 = scalar_lea.sflag [#allocation4], %s175
        %s177 = sand.u32 %s94, 1
        %s178 = smul.addr %s177, 128
        %s179 = scalar_lea.vmem [#allocation5], %s178
        %s180 = smul.u32 4, %s18
        %p181 = scmp.lt.s32.totalorder %s180, 7
        %s182 = scalar_select %p181, %s180, 7
        %s183 = smul.addr %s182, 8
        %s184 = scalar_lea.vmem %s0, %s183
        %s185 = smul.u32 4, %s18
        %s186 = smul.u32 4, %s18
        %v187 = vld [vmem:[%s184] sm:$0xff]
        %v188 = vld [vmem:[%s184 + $0x8] sm:$0xff]
        %v189 = vld [vmem:[%s184 + $0x10] sm:$0xff]
        %v190 = vld [vmem:[%s184 + $0x18] sm:$0xff]
        %v191 = vld [vmem:[#allocation2] sm:$0xff]
        %v192 = vld [vmem:[#allocation2 + $0x8] sm:$0xff]
        %v193 = vld [vmem:[#allocation2 + $0x10] sm:$0xff]
        %v194 = vld [vmem:[#allocation2 + $0x18] sm:$0xff]
        %v195 = vld [vmem:[#allocation2 + $0x20] sm:$0xff]
        %v196 = vld [vmem:[#allocation2 + $0x28] sm:$0xff]
        %v197 = vld [vmem:[#allocation2 + $0x30] sm:$0xff]
        %v198 = vld [vmem:[#allocation2 + $0x38] sm:$0xff]
        %v199 = vld [vmem:[#allocation2 + $0x40] sm:$0xff]
        %v200 = vld [vmem:[#allocation2 + $0x48] sm:$0xff]
        %v201 = vld [vmem:[#allocation2 + $0x50] sm:$0xff]
        %v202 = vld [vmem:[#allocation2 + $0x58] sm:$0xff]
        %v203 = vld [vmem:[#allocation2 + $0x60] sm:$0xff]
        %v204 = vld [vmem:[#allocation2 + $0x68] sm:$0xff]
        %v205 = vld [vmem:[#allocation2 + $0x70] sm:$0xff]
        %v206 = vld [vmem:[#allocation2 + $0x78] sm:$0xff]
        %v207 = vld [vmem:[%s1] ss:$4 sm:$0xf]
        %209 = vset.pattern.permute.xlu0 0
        %210 = vperm.xlu0 %209, %v187
        %v211 = vpop.permute.xlu0 %210
        %214 = vset.pattern.permute.xlu0 0
        %215 = vperm.xlu0 %214, %v188
        %v216 = vpop.permute.xlu0 %215
        %219 = vset.pattern.permute.xlu0 0
        %220 = vperm.xlu0 %219, %v189
        %v221 = vpop.permute.xlu0 %220
        %224 = vset.pattern.permute.xlu0 0
        %225 = vperm.xlu0 %224, %v190
        %v226 = vpop.permute.xlu0 %225
        %v229 = vlaneseq
        %v230 = vshrl.u32 %v229, 7
        %v231 = vsub.s32 0, %v230
        %v232 = vrot.slane %v207, %v231
        %v233 = vlaneseq
        %v234 = vshrl.u32 %v233, 7
        %v235 = vsub.s32 1, %v234
        %v236 = vrot.slane %v207, %v235
        %v237 = vlaneseq
        %v238 = vshrl.u32 %v237, 7
        %v239 = vsub.s32 2, %v238
        %v240 = vrot.slane %v207, %v239
        %v241 = vlaneseq
        %v242 = vshrl.u32 %v241, 7
        %v243 = vsub.s32 3, %v242
        %v244 = vrot.slane %v207, %v243
        %v249 = vmul.f32 %v211, %v232
        %v250 = vmul.f32 %v211, %v236
        %v251 = vmul.f32 %v211, %v240
        %v252 = vmul.f32 %v211, %v244
        %v253 = vmul.f32 %v216, %v232
        %v254 = vmul.f32 %v216, %v236
        %v255 = vmul.f32 %v216, %v240
        %v256 = vmul.f32 %v216, %v244
        %v257 = vmul.f32 %v221, %v232
        %v258 = vmul.f32 %v221, %v236
        %v259 = vmul.f32 %v221, %v240
        %v260 = vmul.f32 %v221, %v244
        %v261 = vmul.f32 %v226, %v232
        %v262 = vmul.f32 %v226, %v236
        %v263 = vmul.f32 %v226, %v240
        %v264 = vmul.f32 %v226, %v244
        %v265 = vadd.f32 %v191, %v249
        %v266 = vadd.f32 %v192, %v250
        %v267 = vadd.f32 %v193, %v251
        %v268 = vadd.f32 %v194, %v252
        %v269 = vadd.f32 %v195, %v253
        %v270 = vadd.f32 %v196, %v254
        %v271 = vadd.f32 %v197, %v255
        %v272 = vadd.f32 %v198, %v256
        %v273 = vadd.f32 %v199, %v257
        %v274 = vadd.f32 %v200, %v258
        %v275 = vadd.f32 %v201, %v259
        %v276 = vadd.f32 %v202, %v260
        %v277 = vadd.f32 %v203, %v261
        %v278 = vadd.f32 %v204, %v262
        %v279 = vadd.f32 %v205, %v263
        %v280 = vadd.f32 %v206, %v264
        %s281 = scalar_lea.vmem %s1, 1
        %v282 = vld [vmem:[%s281] ss:$4 sm:$0xf]
        %283 = vset.pattern.permute.xlu0 1
        %284 = vperm.xlu0 %283, %v187
        %v285 = vpop.permute.xlu0 %284
        %287 = vset.pattern.permute.xlu0 1
        %288 = vperm.xlu0 %287, %v188
        %v289 = vpop.permute.xlu0 %288
        %291 = vset.pattern.permute.xlu0 1
        %292 = vperm.xlu0 %291, %v189
        %v293 = vpop.permute.xlu0 %292
        %295 = vset.pattern.permute.xlu0 1
        %296 = vperm.xlu0 %295, %v190
        %v297 = vpop.permute.xlu0 %296
        %v300 = vlaneseq
        %v301 = vshrl.u32 %v300, 7
        %v302 = vsub.s32 0, %v301
        %v303 = vrot.slane %v282, %v302
        %v304 = vlaneseq
        %v305 = vshrl.u32 %v304, 7
        %v306 = vsub.s32 1, %v305
        %v307 = vrot.slane %v282, %v306
        %v308 = vlaneseq
        %v309 = vshrl.u32 %v308, 7
        %v310 = vsub.s32 2, %v309
        %v311 = vrot.slane %v282, %v310
        %v312 = vlaneseq
        %v313 = vshrl.u32 %v312, 7
        %v314 = vsub.s32 3, %v313
        %v315 = vrot.slane %v282, %v314
        %v320 = vmul.f32 %v285, %v303
        %v321 = vmul.f32 %v285, %v307
        %v322 = vmul.f32 %v285, %v311
        %v323 = vmul.f32 %v285, %v315
        %v324 = vmul.f32 %v289, %v303
        %v325 = vmul.f32 %v289, %v307
        %v326 = vmul.f32 %v289, %v311
        %v327 = vmul.f32 %v289, %v315
        %v328 = vmul.f32 %v293, %v303
        %v329 = vmul.f32 %v293, %v307
        %v330 = vmul.f32 %v293, %v311
        %v331 = vmul.f32 %v293, %v315
        %v332 = vmul.f32 %v297, %v303
        %v333 = vmul.f32 %v297, %v307
        %v334 = vmul.f32 %v297, %v311
        %v335 = vmul.f32 %v297, %v315
        %v336 = vadd.f32 %v265, %v320
        %v337 = vadd.f32 %v266, %v321
        %v338 = vadd.f32 %v267, %v322
        %v339 = vadd.f32 %v268, %v323
        %v340 = vadd.f32 %v269, %v324
        %v341 = vadd.f32 %v270, %v325
        %v342 = vadd.f32 %v271, %v326
        %v343 = vadd.f32 %v272, %v327
        %v344 = vadd.f32 %v273, %v328
        %v345 = vadd.f32 %v274, %v329
        %v346 = vadd.f32 %v275, %v330
        %v347 = vadd.f32 %v276, %v331
        %v348 = vadd.f32 %v277, %v332
        %v349 = vadd.f32 %v278, %v333
        %v350 = vadd.f32 %v279, %v334
        %v351 = vadd.f32 %v280, %v335
        %s352 = scalar_lea.vmem %s1, 2
        %v353 = vld [vmem:[%s352] ss:$4 sm:$0xf]
        %354 = vset.pattern.permute.xlu0 2
        %355 = vperm.xlu0 %354, %v187
        %v356 = vpop.permute.xlu0 %355
        %358 = vset.pattern.permute.xlu0 2
        %359 = vperm.xlu0 %358, %v188
        %v360 = vpop.permute.xlu0 %359
        %362 = vset.pattern.permute.xlu0 2
        %363 = vperm.xlu0 %362, %v189
        %v364 = vpop.permute.xlu0 %363
        %366 = vset.pattern.permute.xlu0 2
        %367 = vperm.xlu0 %366, %v190
        %v368 = vpop.permute.xlu0 %367
        %v371 = vlaneseq
        %v372 = vshrl.u32 %v371, 7
        %v373 = vsub.s32 0, %v372
        %v374 = vrot.slane %v353, %v373
        %v375 = vlaneseq
        %v376 = vshrl.u32 %v375, 7
        %v377 = vsub.s32 1, %v376
        %v378 = vrot.slane %v353, %v377
        %v379 = vlaneseq
        %v380 = vshrl.u32 %v379, 7
        %v381 = vsub.s32 2, %v380
        %v382 = vrot.slane %v353, %v381
        %v383 = vlaneseq
        %v384 = vshrl.u32 %v383, 7
        %v385 = vsub.s32 3, %v384
        %v386 = vrot.slane %v353, %v385
        %v391 = vmul.f32 %v356, %v374
        %v392 = vmul.f32 %v356, %v378
        %v393 = vmul.f32 %v356, %v382
        %v394 = vmul.f32 %v356, %v386
        %v395 = vmul.f32 %v360, %v374
        %v396 = vmul.f32 %v360, %v378
        %v397 = vmul.f32 %v360, %v382
        %v398 = vmul.f32 %v360, %v386
        %v399 = vmul.f32 %v364, %v374
        %v400 = vmul.f32 %v364, %v378
        %v401 = vmul.f32 %v364, %v382
        %v402 = vmul.f32 %v364, %v386
        %v403 = vmul.f32 %v368, %v374
        %v404 = vmul.f32 %v368, %v378
        %v405 = vmul.f32 %v368, %v382
        %v406 = vmul.f32 %v368, %v386
        %v407 = vadd.f32 %v336, %v391
        %v408 = vadd.f32 %v337, %v392
        %v409 = vadd.f32 %v338, %v393
        %v410 = vadd.f32 %v339, %v394
        %v411 = vadd.f32 %v340, %v395
        %v412 = vadd.f32 %v341, %v396
        %v413 = vadd.f32 %v342, %v397
        %v414 = vadd.f32 %v343, %v398
        %v415 = vadd.f32 %v344, %v399
        %v416 = vadd.f32 %v345, %v400
        %v417 = vadd.f32 %v346, %v401
        %v418 = vadd.f32 %v347, %v402
        %v419 = vadd.f32 %v348, %v403
        %v420 = vadd.f32 %v349, %v404
        %v421 = vadd.f32 %v350, %v405
        %v422 = vadd.f32 %v351, %v406
        %423 = vst [vmem:[%s179] sm:$0xff] %v407
        %424 = vst [vmem:[%s179 + $0x8] sm:$0xff] %v408
        %425 = vst [vmem:[%s179 + $0x10] sm:$0xff] %v409
        %426 = vst [vmem:[%s179 + $0x18] sm:$0xff] %v410
        %427 = vst [vmem:[%s179 + $0x20] sm:$0xff] %v411
        %428 = vst [vmem:[%s179 + $0x28] sm:$0xff] %v412
        %429 = vst [vmem:[%s179 + $0x30] sm:$0xff] %v413
        %430 = vst [vmem:[%s179 + $0x38] sm:$0xff] %v414
        %431 = vst [vmem:[%s179 + $0x40] sm:$0xff] %v415
        %432 = vst [vmem:[%s179 + $0x48] sm:$0xff] %v416
        %433 = vst [vmem:[%s179 + $0x50] sm:$0xff] %v417
        %434 = vst [vmem:[%s179 + $0x58] sm:$0xff] %v418
        %435 = vst [vmem:[%s179 + $0x60] sm:$0xff] %v419
        %436 = vst [vmem:[%s179 + $0x68] sm:$0xff] %v420
        %437 = vst [vmem:[%s179 + $0x70] sm:$0xff] %v421
        %438 = vst [vmem:[%s179 + $0x78] sm:$0xff] %v422
        %s439 = sand.u32 %s94, 1
        %s440 = scalar_lea.sflag [#allocation4], %s439
        %s441 = sand.u32 %s94, 1
        %s442 = smul.addr %s441, 128
        %s443 = scalar_lea.vmem [#allocation5], %s442
        // Predicated region
        $region37: #{tpu_custom_call.1} parent=31 // pred_check
          %p444 = pneg %p104
        $region38: #{tpu_custom_call.1} parent=31 // pred_check_branch
          %446 = sbr.rel (%p444) target = $region40
        $region39: #{tpu_custom_call.1} parent=31 // pred_region
          %s447 = smul.u32 4, %s18
          %s449 = ssub.s32 2048, 2048
          %450 = vsyncadd %s440, %s449
          %s451 = smul.addr %s447, 4
          %s452 = smul.addr %s451, 128
          %s453 = scalar_lea.hbm %s3, %s452
          %s454 = sshll.u32 %s443, 4
          %s455 = int_to_ptr.vmem [resolvable:$true] %s454
          %460 = dma.vmem_to_hbm [thread:$0]  %s455, 2048, %s453, %s440, 512, 512, 32
        $region40: #{tpu_custom_call.1} parent=31 // pred_fallthru
          _
      $region32: #{tpu_custom_call.1} parent=5 // pred_fallthru
        _
      %p461 = scmp.le.s32.totalorder 2, %s13
      // Predicated region
      $region41: #{tpu_custom_call.1} parent=5 // pred_check
        %p462 = pneg %p461
      $region42: #{tpu_custom_call.1} parent=5 // pred_check_branch
        %464 = sbr.rel (%p462) target = $region44
      $region43: #{tpu_custom_call.1} parent=5 // pred_region
        %s465 = ssub.s32 %s13, 2
        // Predicated region
        $region45: #{tpu_custom_call.1} parent=43 // pred_check
          %p466 = pneg %p110
        $region46: #{tpu_custom_call.1} parent=43 // pred_check_branch
          %468 = sbr.rel (%p466) target = $region48
        $region47: #{tpu_custom_call.1} parent=43 // pred_region
          %s469 = sand.u32 %s95, 1
          %s470 = scalar_lea.sflag [#allocation4], %s469
          %s471 = sand.u32 %s95, 1
          %s472 = smul.addr %s471, 128
          %s473 = scalar_lea.vmem [#allocation5], %s472
          %474 = dma.done %s470, 2048
        $region48: #{tpu_custom_call.1} parent=43 // pred_fallthru
          _
      $region44: #{tpu_custom_call.1} parent=5 // pred_fallthru
        _
    $region6: #{tpu_custom_call.1} parent=1 // loop_footer
      %s17 = sadd.s32 1, %s13
    $region7: #{tpu_custom_call.1} parent=1 // loop_footer_branch
      %12 = sbr.rel target = $region3
    $region8: #{tpu_custom_call.1} parent=1 // loop_exit
      _
    %475 = vsyncpa [#allocation3], 1
    %s476 = scalar_lea.sflag [#allocation3], 1
    %477 = vsyncpa %s476, 1
    %478 = vsyncpa [#allocation4], 1
    %s479 = scalar_lea.sflag [#allocation4], 1
    %480 = vsyncpa %s479, 1

</llo_original>
